<compile_context>
chip_gen: v7x
topology: tpu7x:2x2x1
jax: 0.10.0
libtpu: 0.0.40
codegen_flags: <defaults>
</compile_context>

<pallas_src>
import functools

import jax
import jax.numpy as jnp
from jax.experimental import pallas as pl
from jax.experimental.pallas import tpu as pltpu


def _round_up(x, m):
    return ((x + m - 1) // m) * m


def _pack_factor(h):
    """How many tokens to pack per 128-lane row."""
    if h >= 128 or 128 % h != 0:
        return 1
    return 128 // h


def _vmem_budget_bytes():
    """Generation-aware scoped-VMEM budget (also used as vmem_limit_bytes)."""
    try:
        kind = jax.devices()[0].device_kind.lower()
    except Exception:
        kind = ""
    if "v7" in kind:
        return 48 * 1024 * 1024        # v7x: 64 MiB physical per TC -> leave headroom
    if "v5" in kind or "v6" in kind:
        return 96 * 1024 * 1024        # v5e / v6e: 128 MiB physical VMEM
    return 32 * 1024 * 1024            # conservative default for other chips


def _choose_tm(m_rows, kp, np_, vmem_budget_bytes):
    """Largest 8-multiple tile (in packed rows) whose double-buffered in+out blocks plus
    the resident weight fit ~75% of the budget; capped so very large problems still get
    >= ~8 grid steps (pipelining + megacore) without shrinking steps below ~6 MB."""
    resident = (kp * np_ + np_) * 4                 # W_big + bias (f32), always resident
    per_row = 2 * (kp + np_) * 4                    # double-buffered in + out, f32
    tm = max(8, (int(vmem_budget_bytes * 0.75) - resident) // per_row)
    tm = min(tm, 16384)                             # ~50 MiB working-set ceiling
    grid_cap = _round_up(pl.cdiv(m_rows, 8), 8)     # tile that yields ~8 grid steps
    if grid_cap >= 4096:                            # only cap when steps stay large
        tm = min(tm, grid_cap)
    if tm >= m_rows:
        return max(1, m_rows)                       # single step: block == full array dims
    return max(8, (tm // 8) * 8)


def ffn_kernel(x_ref, w_ref, b_ref, o_ref):
    # x_ref: (TM, K) packed activations (pipelined); w_ref: (K, N) block-diag W1^T
    # (VMEM-resident); b_ref: (1, N) tiled bias (resident); o_ref: (TM, N).
    y = jnp.dot(x_ref[...], w_ref[...], preferred_element_type=jnp.float32)
    o_ref[...] = (y + b_ref[...]).astype(o_ref.dtype)


@functools.partial(jax.jit, static_argnames=("max_tile_rows",))
def positionwise_feed_forward(x, w1, b1, w2, b2, *, max_tile_rows=None):
    """x: (B, S, H).  w1: (F, H, 1), b1: (F,)  (PyTorch Conv1d param layout).
    w2/b2 unused because the reference forward discards conv2's result."""
    del w2, b2
    B, S, H = x.shape
    F = w1.shape[0]
    M = B * S

    pack = _pack_factor(H)
    Mp = _round_up(M, pack)

    x2d = x.reshape(M, H)
    if Mp != M:
        # Rare path (M % pack != 0): pad a few zero tokens; sliced off after the kernel.
        x2d = jnp.pad(x2d, ((0, Mp - M), (0, 0)))
    m_rows = Mp // pack
    KP, NP = pack * H, pack * F
    xp = x2d.reshape(m_rows, KP)                     # free contiguous view: 4 tokens/row

    # Block-diagonal weight (KP, NP) with W1^T in each diagonal block; encodes the
    # transpose once in the wrapper (tiny: 128x256 f32 = 128 KiB).
    wT = w1[:, :, 0].astype(jnp.float32).T                              # (H, F)
    eye = jnp.eye(pack, dtype=wT.dtype)
    w_big = jnp.einsum("pq,hf->phqf", eye, wT).reshape(KP, NP)
    b_big = jnp.tile(b1.astype(jnp.float32), pack).reshape(1, NP)

    budget = _vmem_budget_bytes()
    TM = _choose_tm(m_rows, KP, NP, budget)
    if max_tile_rows is not None and max_tile_rows < TM:
        TM = max(8, (max_tile_rows // 8) * 8)
        if TM >= m_rows:
            TM = m_rows
    grid_m = pl.cdiv(m_rows, TM)

    cost = pl.CostEstimate(
        flops=2 * m_rows * KP * NP,
        transcendentals=0,
        bytes_accessed=(m_rows * KP + KP * NP + NP + m_rows * NP) * 4,
    )

    outp = pl.pallas_call(
        ffn_kernel,
        out_shape=jax.ShapeDtypeStruct((m_rows, NP), x.dtype),
        grid_spec=pltpu.PrefetchScalarGridSpec(
            num_scalar_prefetch=0,
            grid=(grid_m,),
            in_specs=[
                pl.BlockSpec((TM, KP), lambda i: (i, 0)),   # packed activations (pipelined)
                pl.BlockSpec((KP, NP), lambda i: (0, 0)),   # block-diag W1^T, VMEM-resident
                pl.BlockSpec((1, NP), lambda i: (0, 0)),    # tiled bias, VMEM-resident
            ],
            out_specs=pl.BlockSpec((TM, NP), lambda i: (i, 0)),
        ),
        compiler_params=pltpu.CompilerParams(
            dimension_semantics=("parallel",),              # megacore sharding on v7x
            vmem_limit_bytes=budget,
        ),
        cost_estimate=cost,
    )(xp, w_big, b_big)

    out2d = outp.reshape(Mp, F)
    if Mp != M:
        out2d = out2d[:M]
    return out2d.reshape(B, S, F)


def _reference(x, w1, b1):
    B, S, H = x.shape
    F = w1.shape[0]
    return (x.reshape(-1, H) @ jnp.transpose(w1[:, :, 0]) + b1).reshape(B, S, F)


if __name__ == "__main__":
    # params.hidden_dim = 32, params.feed_forward_dim = 64
    H, F = 32, 64

    key = jax.random.PRNGKey(0)
    kx, kw1, kb1, kw2, kb2, kx2, kx3, kx4 = jax.random.split(key, 8)

    # Deterministic synthetic init (stands in for init_weigth); Conv1d param shapes.
    w1 = jax.random.normal(kw1, (F, H, 1), dtype=jnp.float32) * 0.02
    b1 = jax.random.normal(kb1, (F,), dtype=jnp.float32) * 0.02
    w2 = jax.random.normal(kw2, (H, F, 1), dtype=jnp.float32) * 0.02
    b2 = jax.random.normal(kb2, (H,), dtype=jnp.float32) * 0.02

    # 1) Small shape consistent with the module.
    B, S = 2, 8
    x = jax.random.normal(kx, (B, S, H), dtype=jnp.float32)
    out = jax.block_until_ready(positionwise_feed_forward(x, w1, b1, w2, b2))
    assert out.shape == (B, S, F)
    assert jnp.allclose(out, _reference(x, w1, b1), atol=1e-5, rtol=1e-5)

    # 2) Odd token count (exercises the pad-to-pack-factor + slice path).
    x3 = jax.random.normal(kx3, (1, 7, H), dtype=jnp.float32)
    out3 = jax.block_until_ready(positionwise_feed_forward(x3, w1, b1, w2, b2))
    assert out3.shape == (1, 7, F)
    assert jnp.allclose(out3, _reference(x3, w1, b1), atol=1e-5, rtol=1e-5)

    # 3) Forced small tile -> multi-step grid with a partial last tile.
    B2, S2 = 3, 400        # M = 1200 -> 300 packed rows; TM=128 -> 3 steps, last partial
    x2 = jax.random.normal(kx2, (B2, S2, H), dtype=jnp.float32)
    out2 = jax.block_until_ready(
        positionwise_feed_forward(x2, w1, b1, w2, b2, max_tile_rows=128))
    assert out2.shape == (B2, S2, F)
    assert jnp.allclose(out2, _reference(x2, w1, b1), atol=1e-4, rtol=1e-4)

    # 4) Moderately large shape through the default budget-driven tiling path.
    B4, S4 = 8, 2048
    x4 = jax.random.normal(kx4, (B4, S4, H), dtype=jnp.float32)
    out4 = jax.block_until_ready(positionwise_feed_forward(x4, w1, b1, w2, b2))
    assert out4.shape == (B4, S4, F)
    assert jnp.allclose(out4, _reference(x4, w1, b1), atol=1e-4, rtol=1e-4)

    print("KERNEL_OK")
</pallas_src>

<mosaic_0001>
module attributes {stable_mosaic.version = 11 : i64} {
  func.func @ffn_kernel(%arg0: i32, %arg1: memref<4x128xf32, #tpu.memory_space<vmem>>, %arg2: memref<128x256xf32, #tpu.memory_space<vmem>>, %arg3: memref<1x256xf32, #tpu.memory_space<vmem>>, %arg4: memref<4x256xf32, #tpu.memory_space<vmem>>) attributes {dimension_semantics = [#tpu.dimension_semantics<parallel>], iteration_bounds = array<i64: 1>, scalar_prefetch = 0 : i64, scratch_operands = 0 : i64, tpu.core_type = #tpu.core_type<tc>, window_params = [{transform_indices = @transform_0, window_bounds = array<i64: 4, 128>}, {pipeline_mode = #tpu.pipeline_mode<synchronous>, transform_indices = @transform_1, window_bounds = array<i64: 128, 256>}, {pipeline_mode = #tpu.pipeline_mode<synchronous>, transform_indices = @transform_2, window_bounds = array<i64: 1, 256>}, {transform_indices = @transform_3, window_bounds = array<i64: 4, 256>}]} {
    %c0 = arith.constant 0 : index
    %c0_0 = arith.constant 0 : index
    %0 = vector.load %arg1[%c0, %c0_0] : memref<4x128xf32, #tpu.memory_space<vmem>>, vector<4x128xf32>
    %c0_1 = arith.constant 0 : index
    %c0_2 = arith.constant 0 : index
    %1 = vector.load %arg2[%c0_1, %c0_2] : memref<128x256xf32, #tpu.memory_space<vmem>>, vector<128x256xf32>
    %cst = arith.constant dense<0.000000e+00> : vector<4x256xf32>
    %2 = tpu.matmul %0, %1, %cst {dimension_numbers = #tpu.dot_dimension_numbers<[1], [0], [0], [1], [0, 0, 1, 1], [], []>} : vector<4x128xf32>, vector<128x256xf32>, vector<4x256xf32> -> vector<4x256xf32>
    %c0_3 = arith.constant 0 : index
    %c0_4 = arith.constant 0 : index
    %3 = vector.load %arg3[%c0_3, %c0_4] : memref<1x256xf32, #tpu.memory_space<vmem>>, vector<1x256xf32>
    %4 = vector.broadcast %3 : vector<1x256xf32> to vector<4x256xf32>
    %5 = arith.addf %2, %4 : vector<4x256xf32>
    %c0_5 = arith.constant 0 : index
    %c0_6 = arith.constant 0 : index
    %6 = vector.load %arg4[%c0_5, %c0_6] : memref<4x256xf32, #tpu.memory_space<vmem>>, vector<4x256xf32>
    tpu.vector_store %arg4[%c0_5, %c0_6], %5 {strides = array<i32>} : memref<4x256xf32, #tpu.memory_space<vmem>>, vector<4x256xf32>,
    return
  }
  func.func @transform_0(%arg0: i32) -> (i32, i32) {
    %c0_i32 = arith.constant 0 : i32
    %c0_i32_0 = arith.constant 0 : i32
    return %arg0, %c0_i32 : i32, i32
  }
  func.func @transform_1(%arg0: i32) -> (i32, i32) {
    %c0_i32 = arith.constant 0 : i32
    %c0_i32_0 = arith.constant 0 : i32
    %c0_i32_1 = arith.constant 0 : i32
    return %c0_i32, %c0_i32_0 : i32, i32
  }
  func.func @transform_2(%arg0: i32) -> (i32, i32) {
    %c0_i32 = arith.constant 0 : i32
    %c0_i32_0 = arith.constant 0 : i32
    %c0_i32_1 = arith.constant 0 : i32
    return %c0_i32, %c0_i32_0 : i32, i32
  }
  func.func @transform_3(%arg0: i32) -> (i32, i32) {
    %c0_i32 = arith.constant 0 : i32
    %c0_i32_0 = arith.constant 0 : i32
    return %arg0, %c0_i32 : i32, i32
  }
}

</mosaic_0001>

<llo_original>
// kernel: tile.8
$region0: #{tile.8}
  #allocation0 [shape = 's32[1]{0}', space=sflag, size = 0x4, scoped, tag = 'scoped memory for tile.8']
  %s0 = inlined_call_operand.vmem [shape: f32[64], index: 0, kind: input, shape index: {}]
  %s1 = inlined_call_operand.vmem [shape: f32[4,64], index: 1, kind: output, shape index: {}]
  // Predicated region
  $region2: #{tile.8} parent=0 // pred_check
    _
  $region3: #{tile.8} parent=0 // pred_check_branch
    %3 = sbr.rel (0) target = $region5
  $region4: #{tile.8} parent=0 // pred_region
    _
  $region5: #{tile.8} parent=0 // pred_fallthru
    _
  %v4 = vld [vmem:[%s0] ss:$0 sm:$0xff]
  %5 = vst [vmem:[%s1] sm:$0xf] %v4

// kernel: tile.9
$region0: #{tile.9}
  %s0 = inlined_call_operand.vmem [shape: f32[4,64], index: 0, kind: input, shape index: {}]
  %s1 = inlined_call_operand.vmem [shape: f32[1,256], index: 1, kind: output, shape index: {}]
  $region1: #{tile.9} parent=0
    #allocation0 [shape = 'u8[8192]{0}', space=vmem, size = 0x2000, scoped, tag = 'scoped mem for output reshape']
    #allocation1 [shape = 'u8[4096]{0}', space=vmem, size = 0x1000, scoped, tag = 'scoped mem for input reshape']
    %s3 = sshllo.u32 0, 4
    %v4 = vld [vmem:[%s0] sm:%s3]
    %5 = vst [vmem:[#allocation1] sm:%s3] %v4
    %s6 = smov 3
    %v7 = vld [vmem:[#allocation1] ss:$2 sm:%s6]
    %vm8 = vcmask 523264
    %9 = vst.msk [vmem:[#allocation0] ss:$8 sm:$0x3] %vm8, %v7
    %s10 = scalar_lea.vmem [#allocation1], 1
    %s11 = smov 3
    %v12 = vld [vmem:[%s10] ss:$2 sm:%s11]
    %13 = vrot.lane.b32.xlu0 %v12, 64
    %v14 = vpop.permute.xlu0 %13
    %vm15 = vcmask 1048064
    %16 = vst.msk [vmem:[#allocation0] ss:$8 sm:$0x3] %vm15, %v14
    %s18 = sshllo.u32 0, 1
    %v20 = vld [vmem:[#allocation0] sm:%s18]
    %s21 = sshllo.u32 0, 1
    %22 = vst [vmem:[%s1] sm:%s21] %v20
    %s23 = scalar_lea.vmem [#allocation0], 8
    %v24 = vld [vmem:[%s23] sm:%s18]
    %s25 = sshllo.u32 0, 1
    %s26 = scalar_lea.vmem %s1, 1
    %27 = vst [vmem:[%s26] sm:%s25] %v24

// kernel: positionwise_feed_forward.1
$region0: #{positionwise_feed_forward.1}
  #allocation0 [shape = 'u32[]', space=smem, size = 0x4, offset = 0x4, fixed_abs, tag = 'smem constant byte address 0x4 - core index']
  #allocation1 [shape = 'u32[144,128]{1,0:T(1,128)}', space=vmem, size = 0x12000, scoped, tag = 'internal scratch']
  %s0 = inlined_call_operand.vmem [shape: f32[4,128], index: 0, kind: input, shape index: {}]
  %s1 = inlined_call_operand.vmem [shape: f32[128,256], index: 1, kind: input, shape index: {}]
  %s2 = inlined_call_operand.vmem [shape: f32[1,256], index: 2, kind: input, shape index: {}]
  %s3 = inlined_call_operand.vmem [shape: f32[4,256], index: 3, kind: output, shape index: {}]
  %s4 = sld [smem:[#allocation0]]
  $region22: #{positionwise_feed_forward.1} parent=0
    _
  %s6 = ssub.s32 1, %s4
  %s7 = scalar_select 0, %s6, %s4
  // Predicated region
  $region2: #{positionwise_feed_forward.1} parent=0 // pred_check
    _
  $region3: #{positionwise_feed_forward.1} parent=0 // pred_check_branch
    %9 = sbr.rel (0) target = $region5
  $region4: #{positionwise_feed_forward.1} parent=0 // pred_region
    _
  $region5: #{positionwise_feed_forward.1} parent=0 // pred_fallthru
    _
  // Predicated region
  $region6: #{positionwise_feed_forward.1} parent=0 // pred_check
    _
  $region7: #{positionwise_feed_forward.1} parent=0 // pred_check_branch
    %11 = sbr.rel (0) target = $region9
  $region8: #{positionwise_feed_forward.1} parent=0 // pred_region
    _
  $region9: #{positionwise_feed_forward.1} parent=0 // pred_fallthru
    _
  // Predicated region
  $region10: #{positionwise_feed_forward.1} parent=0 // pred_check
    _
  $region11: #{positionwise_feed_forward.1} parent=0 // pred_check_branch
    %13 = sbr.rel (0) target = $region13
  $region12: #{positionwise_feed_forward.1} parent=0 // pred_region
    _
  $region13: #{positionwise_feed_forward.1} parent=0 // pred_fallthru
    _
  %v14 = vld [vmem:[%s0] sm:$0xf]
  %v15 = vld [vmem:[%s1] sm:$0xff]
  %v16 = vld [vmem:[%s1 + $0x8] sm:$0xff]
  %v17 = vld [vmem:[%s1 + $0x10] sm:$0xff]
  %v18 = vld [vmem:[%s1 + $0x18] sm:$0xff]
  %v19 = vld [vmem:[%s1 + $0x20] sm:$0xff]
  %v20 = vld [vmem:[%s1 + $0x28] sm:$0xff]
  %v21 = vld [vmem:[%s1 + $0x30] sm:$0xff]
  %v22 = vld [vmem:[%s1 + $0x38] sm:$0xff]
  %v23 = vld [vmem:[%s1 + $0x40] sm:$0xff]
  %v24 = vld [vmem:[%s1 + $0x48] sm:$0xff]
  %v25 = vld [vmem:[%s1 + $0x50] sm:$0xff]
  %v26 = vld [vmem:[%s1 + $0x58] sm:$0xff]
  %v27 = vld [vmem:[%s1 + $0x60] sm:$0xff]
  %v28 = vld [vmem:[%s1 + $0x68] sm:$0xff]
  %v29 = vld [vmem:[%s1 + $0x70] sm:$0xff]
  %v30 = vld [vmem:[%s1 + $0x78] sm:$0xff]
  %v31 = vld [vmem:[%s1 + $0x80] sm:$0xff]
  %v32 = vld [vmem:[%s1 + $0x88] sm:$0xff]
  %v33 = vld [vmem:[%s1 + $0x90] sm:$0xff]
  %v34 = vld [vmem:[%s1 + $0x98] sm:$0xff]
  %v35 = vld [vmem:[%s1 + $0xa0] sm:$0xff]
  %v36 = vld [vmem:[%s1 + $0xa8] sm:$0xff]
  %v37 = vld [vmem:[%s1 + $0xb0] sm:$0xff]
  %v38 = vld [vmem:[%s1 + $0xb8] sm:$0xff]
  %v39 = vld [vmem:[%s1 + $0xc0] sm:$0xff]
  %v40 = vld [vmem:[%s1 + $0xc8] sm:$0xff]
  %v41 = vld [vmem:[%s1 + $0xd0] sm:$0xff]
  %v42 = vld [vmem:[%s1 + $0xd8] sm:$0xff]
  %v43 = vld [vmem:[%s1 + $0xe0] sm:$0xff]
  %v44 = vld [vmem:[%s1 + $0xe8] sm:$0xff]
  %v45 = vld [vmem:[%s1 + $0xf0] sm:$0xff]
  %v46 = vld [vmem:[%s1 + $0xf8] sm:$0xff]
  %v47 = vld [vmem:[%s2] sm:$0x3]
  %v49 = vlaneseq
  %v50 = vshrl.u32 %v49, 7
  %v51 = vsub.s32 0, %v50
  %v52 = vrot.slane %v47, %v51
  %v53 = vlaneseq
  %v54 = vshrl.u32 %v53, 7
  %v55 = vsub.s32 1, %v54
  %v56 = vrot.slane %v47, %v55
  %59 = vmatprep.subr.mxu0 %v16
  %60 = vmatpush1.msra.mxu0 %v15
  %61 = vmatprep.subr.mxu0 %v18
  %62 = vmatpush1.msra.mxu0 %v17
  %63 = vmatprep.subr.mxu0 %v20
  %64 = vmatpush1.msra.mxu0 %v19
  %65 = vmatprep.subr.mxu0 %v22
  %66 = vmatpush1.msra.mxu0 %v21
  %67 = vmatprep.subr.mxu0 %v24
  %68 = vmatpush1.msra.mxu0 %v23
  %69 = vmatprep.subr.mxu0 %v26
  %70 = vmatpush1.msra.mxu0 %v25
  %71 = vmatprep.subr.mxu0 %v28
  %72 = vmatpush1.msra.mxu0 %v27
  %73 = vmatprep.subr.mxu0 %v30
  %74 = vmatpush1.msra.mxu0 %v29
  %75 = vmatprep.subr.mxu0 %v32
  %76 = vmatpush1.msra.mxu0 %v31
  %77 = vmatprep.subr.mxu0 %v34
  %78 = vmatpush1.msra.mxu0 %v33
  %79 = vmatprep.subr.mxu0 %v36
  %80 = vmatpush1.msra.mxu0 %v35
  %81 = vmatprep.subr.mxu0 %v38
  %82 = vmatpush1.msra.mxu0 %v37
  %83 = vmatprep.subr.mxu0 %v40
  %84 = vmatpush1.msra.mxu0 %v39
  %85 = vmatprep.subr.mxu0 %v42
  %86 = vmatpush1.msra.mxu0 %v41
  %87 = vmatprep.subr.mxu0 %v44
  %88 = vmatpush1.msra.mxu0 %v43
  %89 = vmatprep.subr.mxu0 %v46
  %90 = vmatpush1.msra.mxu0 %v45
  %91 = vmatprep.subr.mxu0 0.0
  %92 = vmatpush1.msra.mxu0 0.0
  %93 = vmatprep.subr.mxu0 0.0
  %94 = vmatpush1.msra.mxu0 0.0
  %95 = vmatprep.subr.mxu0 0.0
  %96 = vmatpush1.msra.mxu0 0.0
  %97 = vmatprep.subr.mxu0 0.0
  %98 = vmatpush1.msra.mxu0 0.0
  %99 = vmatprep.subr.mxu0 0.0
  %100 = vmatpush1.msra.mxu0 0.0
  %101 = vmatprep.subr.mxu0 0.0
  %102 = vmatpush1.msra.mxu0 0.0
  %103 = vmatprep.subr.mxu0 0.0
  %104 = vmatpush1.msra.mxu0 0.0
  %105 = vmatprep.subr.mxu0 0.0
  %106 = vmatpush1.msra.mxu0 0.0
  %107 = vmatprep.subr.mxu0 0.0
  %108 = vmatpush1.msra.mxu0 0.0
  %109 = vmatprep.subr.mxu0 0.0
  %110 = vmatpush1.msra.mxu0 0.0
  %111 = vmatprep.subr.mxu0 0.0
  %112 = vmatpush1.msra.mxu0 0.0
  %113 = vmatprep.subr.mxu0 0.0
  %114 = vmatpush1.msra.mxu0 0.0
  %115 = vmatprep.subr.mxu0 0.0
  %116 = vmatpush1.msra.mxu0 0.0
  %117 = vmatprep.subr.mxu0 0.0
  %118 = vmatpush1.msra.mxu0 0.0
  %119 = vmatprep.subr.mxu0 0.0
  %120 = vmatpush1.msra.mxu0 0.0
  %121 = vmatprep.subr.mxu0 0.0
  %122 = vmatpush1.msra.mxu0 0.0
  %123 = vmatprep.mubr.f32.mxu0 0.0
  %124 = vmatmul.mubr.f32.gmra.mrb[0].mxu0 %v14
  %v125 = vpop.f32.mrb[0].mxu0
  %v126 = vadd.f32 %v52, %v125
  %v127 = vpop.f32.mrb[0].mxu0
  %v128 = vadd.f32 %v56, %v127
  %129 = vdwg.mxu0
  %v132 = vcombine.low %v126, %v128
  %134 = vst [vmem:[%s3] sm:$0xff] %v132
  // Predicated region
  $region14: #{positionwise_feed_forward.1} parent=0 // pred_check
    _
  $region15: #{positionwise_feed_forward.1} parent=0 // pred_check_branch
    %136 = sbr.rel (0) target = $region17
  $region16: #{positionwise_feed_forward.1} parent=0 // pred_region
    _
  $region17: #{positionwise_feed_forward.1} parent=0 // pred_fallthru
    _
  // Predicated region
  $region18: #{positionwise_feed_forward.1} parent=0 // pred_check
    _
  $region19: #{positionwise_feed_forward.1} parent=0 // pred_check_branch
    %138 = sbr.rel (0) target = $region21
  $region20: #{positionwise_feed_forward.1} parent=0 // pred_region
    _
  $region21: #{positionwise_feed_forward.1} parent=0 // pred_fallthru
    _

</llo_original>
